<compile_context>
chip_gen: v7x
topology: tpu7x:2x2x1
jax: 0.10.0
libtpu: 0.0.40
codegen_flags: <defaults>
</compile_context>

<pallas_src>
import math
import functools

import jax
import jax.numpy as jnp
from jax.experimental import pallas as pl
from jax.experimental.pallas import tpu as pltpu

TAU = 0.5
LEAKY_SLOPE = 0.1
_EPS = 1e-12
_VMEM_LIMIT = 32 * 1024 * 1024      # >= scoped defaults on v5e/v6e/v7x


def _round_up(x, m):
    return ((x + m - 1) // m) * m


def _nbytes(*arrs):
    return int(sum(int(a.size) * a.dtype.itemsize for a in arrs))


# --------------------------------------------------------------------------
# Kernel 1: per-edge contrastive weight, all etypes fused, edges on lanes.
# Inputs arrive bf16 (halved HBM traffic); reductions are upcast to f32.
# --------------------------------------------------------------------------
def _edge_weight_kernel(rf_ref, cf_ref, ra_ref, ca_ref, rev_ref, proto_ref,
                        eta_ref, out_ref, *, k_sel):
    f32 = jnp.float32
    rf = rf_ref[0].astype(f32)                                    # [D, TE]
    cf = cf_ref[0].astype(f32)
    inv_r = jax.lax.rsqrt(
        jnp.maximum(jnp.sum(rf * rf, axis=0, keepdims=True), _EPS * _EPS))
    inv_c = jax.lax.rsqrt(
        jnp.maximum(jnp.sum(cf * cf, axis=0, keepdims=True), _EPS * _EPS))
    sim_k = jnp.sum(rf * cf, axis=0, keepdims=True) * inv_r * inv_c * (1.0 / TAU)

    K = ra_ref.shape[1]
    # per-k unrolled reductions keep D on sublanes / edges on lanes (K=3 tiny)
    sim_all = [jnp.sum(ra_ref[0, k].astype(f32) * ca_ref[0, k].astype(f32),
                       axis=0, keepdims=True) * (1.0 / TAU) for k in range(K)]
    m = sim_k
    for s in sim_all:
        m = jnp.maximum(m, s)
    den = jnp.zeros_like(sim_k)
    for s in sim_all:
        den = den + jnp.exp(s - m)
    exp_sim = jnp.exp(sim_k - m) / den          # == exp(sim_k)/sum(exp(sim_all))

    review_k = rev_ref[0, k_sel].astype(f32)                      # [Dr, TE]
    proto_k = proto_ref[:, k_sel:k_sel + 1]                       # [Dr, 1]
    anc_k = jnp.sum(review_k * proto_k, axis=0, keepdims=True) * (1.0 / TAU)
    anc_all = [jnp.sum(rev_ref[0, k].astype(f32) * proto_ref[:, k:k + 1],
                       axis=0, keepdims=True) * (1.0 / TAU) for k in range(K)]
    ma = anc_k
    for a in anc_all:
        ma = jnp.maximum(ma, a)
    den_a = jnp.zeros_like(anc_k)
    for a in anc_all:
        den_a = den_a + jnp.exp(a - ma)
    exp_anchor = jnp.exp(anc_k - ma) / den_a

    g = 1.0 / (1.0 + jnp.exp(-eta_ref[0]))                        # sigmoid(eta)
    out_ref[0] = g * exp_anchor + (1.0 - g) * exp_sim             # [1, TE]


def edge_weight_fused(rf_t, cf_t, ra_t, ca_t, rev_t, proto_t, eta_t,
                      *, k_sel, tile_e):
    n_et, D, e_pad = rf_t.shape
    K = ra_t.shape[1]
    Dr = rev_t.shape[2]
    n_tiles = e_pad // tile_e
    kern = functools.partial(_edge_weight_kernel, k_sel=k_sel)
    flops = n_et * e_pad * (6 * D + 2 * K * D + 2 * (K + 1) * Dr + 32)
    trans = n_et * e_pad * (2 * (K + 1) + 4)
    nbytes = _nbytes(rf_t, cf_t, ra_t, ca_t, rev_t, proto_t, eta_t) + n_et * e_pad * 4
    return pl.pallas_call(
        kern,
        out_shape=jax.ShapeDtypeStruct((n_et, 1, e_pad), jnp.float32),
        grid_spec=pltpu.PrefetchScalarGridSpec(
            num_scalar_prefetch=0,
            grid=(n_et, n_tiles),
            in_specs=[
                pl.BlockSpec((1, D, tile_e), lambda t, i: (t, 0, i)),
                pl.BlockSpec((1, D, tile_e), lambda t, i: (t, 0, i)),
                pl.BlockSpec((1, K, D, tile_e), lambda t, i: (t, 0, 0, i)),
                pl.BlockSpec((1, K, D, tile_e), lambda t, i: (t, 0, 0, i)),
                pl.BlockSpec((1, K, Dr, tile_e), lambda t, i: (t, 0, 0, i)),
                pl.BlockSpec((Dr, K), lambda t, i: (0, 0)),
                pl.BlockSpec((1, 1, tile_e), lambda t, i: (t, 0, i)),
            ],
            out_specs=pl.BlockSpec((1, 1, tile_e), lambda t, i: (t, 0, i)),
        ),
        compiler_params=pltpu.CompilerParams(
            dimension_semantics=("parallel", "parallel"),
            vmem_limit_bytes=_VMEM_LIMIT),
        cost_estimate=pl.CostEstimate(flops=int(flops), transcendentals=int(trans),
                                      bytes_accessed=int(nbytes)),
    )(rf_t, cf_t, ra_t, ca_t, rev_t, proto_t, eta_t)


# --------------------------------------------------------------------------
# Kernel 2: GCMCGraphConv per-edge messages, all etypes fused, edges on lanes.
#   msg^T = (W_node @ src^T + W_rev @ review^T) * w          ([Do, tile_e])
# src^T is the SAME gathered bf16 array kernel 1 consumed; the review tensor
# is the same stacked [n_et, K, Dr, e_pad] array (k-slice picked by index_map).
# Indexed gather / scatter-sum of node rows stays in glue (no one-hot).
# --------------------------------------------------------------------------
def _message_kernel(rf_ref, rev_ref, wn_ref, wr_ref, w_ref, out_ref):
    h = jnp.dot(wn_ref[0], rf_ref[0], preferred_element_type=jnp.float32)
    r = jnp.dot(wr_ref[0], rev_ref[0, 0], preferred_element_type=jnp.float32)
    # TODO(synk): dropout on edge weight 'w' omitted (dropout_rate = 0.0 / eval)
    out_ref[0] = (h + r) * w_ref[0]                               # [Do, TE]


def message_fused(rf_t, rev_t, wn, wr, w_e, *, k_sel, tile_e):
    n_et, D, e_pad = rf_t.shape
    K, Dr = rev_t.shape[1], rev_t.shape[2]
    Do = wn.shape[1]
    n_tiles = e_pad // tile_e
    flops = n_et * e_pad * (2 * Do * (D + Dr) + 2 * Do)
    nbytes = (_nbytes(rf_t, wn, wr, w_e) + n_et * Dr * e_pad * rev_t.dtype.itemsize
              + n_et * Do * e_pad * 4)
    return pl.pallas_call(
        _message_kernel,
        out_shape=jax.ShapeDtypeStruct((n_et, Do, e_pad), jnp.float32),
        grid_spec=pltpu.PrefetchScalarGridSpec(
            num_scalar_prefetch=0,
            grid=(n_et, n_tiles),
            in_specs=[
                pl.BlockSpec((1, D, tile_e), lambda t, i: (t, 0, i)),
                pl.BlockSpec((1, 1, Dr, tile_e), lambda t, i: (t, k_sel, 0, i)),
                pl.BlockSpec((1, Do, D), lambda t, i: (t, 0, 0)),
                pl.BlockSpec((1, Do, Dr), lambda t, i: (t, 0, 0)),
                pl.BlockSpec((1, 1, tile_e), lambda t, i: (t, 0, i)),
            ],
            out_specs=pl.BlockSpec((1, Do, tile_e), lambda t, i: (t, 0, i)),
        ),
        compiler_params=pltpu.CompilerParams(
            dimension_semantics=("parallel", "parallel"),
            vmem_limit_bytes=_VMEM_LIMIT),
        cost_estimate=pl.CostEstimate(flops=int(flops), transcendentals=0,
                                      bytes_accessed=int(nbytes)),
    )(rf_t, rev_t, wn, wr, w_e)


# --------------------------------------------------------------------------
# Kernel 3: LeakyReLU(0.1) + Linear, transposed (nodes on lanes); ufc and ifc
# fused as two heads.  Output has exactly out_units rows (no lane padding).
# --------------------------------------------------------------------------
def _fc_kernel(x_ref, w_ref, b_ref, out_ref):
    x = x_ref[0]                                                  # [Din, TN]
    x = jnp.where(x >= 0, x, LEAKY_SLOPE * x)
    y = jnp.dot(w_ref[0], x, preferred_element_type=jnp.float32)  # [Dout, TN]
    out_ref[0] = y + b_ref[0]


def fc_fused(x, w, b, *, tile_n):
    n_head, d_in, n_pad = x.shape
    d_out = w.shape[1]
    n_tiles = n_pad // tile_n
    flops = n_head * n_pad * (2 * d_out * d_in + 2 * d_in)
    nbytes = _nbytes(x, w, b) + n_head * d_out * n_pad * 4
    return pl.pallas_call(
        _fc_kernel,
        out_shape=jax.ShapeDtypeStruct((n_head, d_out, n_pad), jnp.float32),
        grid_spec=pltpu.PrefetchScalarGridSpec(
            num_scalar_prefetch=0,
            grid=(n_head, n_tiles),
            in_specs=[
                pl.BlockSpec((1, d_in, tile_n), lambda h, i: (h, 0, i)),
                pl.BlockSpec((1, d_out, d_in), lambda h, i: (h, 0, 0)),
                pl.BlockSpec((1, d_out, 1), lambda h, i: (h, 0, 0)),
            ],
            out_specs=pl.BlockSpec((1, d_out, tile_n), lambda h, i: (h, 0, i)),
        ),
        compiler_params=pltpu.CompilerParams(
            dimension_semantics=("parallel", "parallel"),
            vmem_limit_bytes=_VMEM_LIMIT),
        cost_estimate=pl.CostEstimate(flops=int(flops), transcendentals=0,
                                      bytes_accessed=int(nbytes)),
    )(x, w, b)


# --------------------------------------------------------------------------
# Glue: GCMCLayer forward
# --------------------------------------------------------------------------
def gcmc_layer_forward(cfg, graph, params, prototypes_all, review_feat_dic,
                       feat_k, feat_sum):
    num_user, num_movie = cfg["num_user"], cfg["num_movie"]
    k_sel, E, D, out_units = cfg["k"], cfg["E"], cfg["D"], cfg["out_units"]
    etypes = cfg["etypes"]
    n_et = len(etypes)

    tile_e = min(2048, _round_up(E, 128))
    e_pad = _round_up(E, tile_e)

    # ---- one-time lane-dense bf16 copies of the tables (no per-call E-sized
    #      transposes; gathers below come out edges-last directly) ----
    rset = []
    for (_, e, _) in etypes:
        if e[-1] not in rset:
            rset.append(e[-1])
    featT, fsumT, revT = {}, {}, {}
    for nt in ("user", "movie"):
        featT[nt], fsumT[nt] = {}, {}
        for r in rset:
            featT[nt][r] = feat_k[nt]["h_" + r].T.astype(jnp.bfloat16)       # [D, N]
            fsumT[nt][r] = jnp.transpose(
                feat_sum[nt]["h_sum" + r], (1, 2, 0)).astype(jnp.bfloat16)   # [K, D, N]
    for r in rset:
        rt = jnp.transpose(review_feat_dic[r], (1, 2, 0)).astype(jnp.bfloat16)
        revT[r] = jnp.pad(rt, ((0, 0), (0, 0), (0, e_pad - E)))              # [K, Dr, e_pad]

    # ---- Pass 1: fused per-edge contrastive weights (one pallas_call) ----
    rows, cols = [], []
    rf_l, cf_l, ra_l, ca_l, rev_l, eta_l = [], [], [], [], [], []
    for (u, e, v) in etypes:
        r = e[-1]
        rating = int(r) - 1
        row, col = graph[(u, e, v)]
        rows.append(row)
        cols.append(col)
        row_p = jnp.pad(row, (0, e_pad - E))
        col_p = jnp.pad(col, (0, e_pad - E))
        rf_l.append(jnp.take(featT[u][r], row_p, axis=1))          # [D, e_pad]
        cf_l.append(jnp.take(featT[v][r], col_p, axis=1))
        ra_l.append(jnp.take(fsumT[u][r], row_p, axis=2))          # [K, D, e_pad]
        ca_l.append(jnp.take(fsumT[v][r], col_p, axis=2))
        rev_l.append(revT[r])                                      # [K, Dr, e_pad]
        eta_l.append(jnp.pad(params["eta"][rating][:E], (0, e_pad - E))[None, :])

    rf_all = jnp.stack(rf_l)                 # reused by pass 2 (single gather)
    rev_all = jnp.stack(rev_l)               # reused by pass 2 (k-slice via index_map)
    ea_all = edge_weight_fused(
        rf_all, jnp.stack(cf_l), jnp.stack(ra_l), jnp.stack(ca_l), rev_all,
        prototypes_all.T, jnp.stack(eta_l), k_sel=k_sel, tile_e=tile_e)
    ea = [ea_all[t, 0, :E] for t in range(n_et)]

    # ---- degree-style normalization ----
    # TODO(synk): indexed segment-sums kept in glue (.at[].add); an in-Pallas
    # dst-sorted segment-sum (scalar-prefetched offsets) would remove the XLA
    # scatters that dominate for very large edge counts.
    norm_user = jnp.zeros((num_user,), jnp.float32)
    norm_movie = jnp.zeros((num_movie,), jnp.float32)
    for t, (u, e, v) in enumerate(etypes):
        if u == "movie":
            norm_movie = norm_movie.at[rows[t]].add(ea[t])
            norm_user = norm_user.at[cols[t]].add(ea[t])
        else:
            norm_user = norm_user.at[rows[t]].add(ea[t])
            norm_movie = norm_movie.at[cols[t]].add(ea[t])
    norm_user = norm_user / 2.0
    norm_movie = norm_movie / 2.0

    edge_w, int_dist = [], []
    for t, (u, e, v) in enumerate(etypes):
        if u == "movie":
            n_ij = jnp.sqrt(norm_movie[rows[t]] * norm_user[cols[t]])
        else:
            n_ij = jnp.sqrt(norm_user[rows[t]] * norm_movie[cols[t]])
        w_t = ea[t] / jnp.maximum(n_ij, _EPS)
        edge_w.append(w_t)
        if u == "movie":
            int_dist.append(w_t[:, None])
    int_dist = jnp.concatenate(int_dist, axis=0)

    # ---- Pass 2: fused per-edge messages (one pallas_call, edges on lanes) ----
    wn_all = jnp.stack([params["conv"][e]["W_node"]
                        for (_, e, _) in etypes]).astype(jnp.bfloat16)   # [n_et, Do, D]
    wr_all = jnp.stack([params["conv"][e]["W_rev"]
                        for (_, e, _) in etypes]).astype(jnp.bfloat16)   # [n_et, Do, Dr]
    w_all = jnp.stack([jnp.pad(edge_w[t], (0, e_pad - E))[None, :]
                       for t in range(n_et)])                            # [n_et, 1, e_pad]
    msgs_t = message_fused(rf_all, rev_all, wn_all, wr_all, w_all,
                           k_sel=k_sel, tile_e=tile_e)                   # [n_et, Do, e_pad]
    Do = wn_all.shape[1]

    # scatter-sum onto destination nodes (HeteroGraphConv aggregate='sum')
    aggT = {"user": jnp.zeros((Do, num_user), jnp.float32),
            "movie": jnp.zeros((Do, num_movie), jnp.float32)}
    for t, (u, e, v) in enumerate(etypes):
        aggT[v] = aggT[v].at[:, cols[t]].add(msgs_t[t, :, :E])

    # ---- Pass 3: LeakyReLU + ufc/ifc (one pallas_call, nodes on lanes) ----
    n_max = max(num_user, num_movie)
    tile_n = min(8192, _round_up(n_max, 128))
    n_pad = _round_up(n_max, tile_n)
    x = jnp.stack([
        jnp.pad(aggT["user"], ((0, 0), (0, n_pad - num_user))),
        jnp.pad(aggT["movie"], ((0, 0), (0, n_pad - num_movie))),
    ])                                                                   # [2, Do, n_pad]
    w_fc = jnp.stack([params["ufc_w"], params["ifc_w"]])                 # [2, out, Do]
    b_fc = jnp.stack([params["ufc_b"], params["ifc_b"]])[:, :, None]     # [2, out, 1]
    y = fc_fused(x, w_fc, b_fc, tile_n=tile_n)                           # [2, out, n_pad]
    ufeat = y[0, :, :num_user].T
    ifeat = y[1, :, :num_movie].T
    # TODO(synk): dropout (rate 0.0 / eval) is identity and omitted
    return ufeat, ifeat, int_dist


# --------------------------------------------------------------------------
# Deterministic parameter / input construction
# --------------------------------------------------------------------------
def xavier_uniform(key, shape):
    fan_out, fan_in = shape
    bound = math.sqrt(6.0 / (fan_in + fan_out))
    return jax.random.uniform(key, shape, jnp.float32, -bound, bound)


if __name__ == "__main__":
    num_factor = 2
    msg_units = 64 // num_factor        # 32
    out_units = 16
    num_user, num_movie = 8, 8
    rating_vals = [1, 2]
    num_rating = 16                     # >= number of edges per etype
    K = 3
    k_sel = 1
    E = 8                               # edges per canonical etype
    D = 64 // num_factor                # 32
    Dr = msg_units * num_factor         # 64

    etypes = []
    for r in rating_vals:
        etypes.append(("user", str(r), "movie"))
        etypes.append(("movie", "rev-" + str(r), "user"))

    cfg = dict(num_user=num_user, num_movie=num_movie, k=k_sel, E=E, D=D,
               out_units=out_units, etypes=etypes)

    key = jax.random.PRNGKey(0)
    keys = iter(jax.random.split(key, 128))

    graph = {}
    for r in rating_vals:
        row = jax.random.randint(next(keys), (E,), 0, num_user)
        col = jax.random.randint(next(keys), (E,), 0, num_movie)
        graph[("user", str(r), "movie")] = (row, col)
        graph[("movie", "rev-" + str(r), "user")] = (col, row)

    feat_k = {"user": {}, "movie": {}}
    feat_sum = {"user": {}, "movie": {}}
    for nt, n in (("user", num_user), ("movie", num_movie)):
        for r in rating_vals:
            feat_k[nt]["h_" + str(r)] = jax.random.normal(next(keys), (n, D), jnp.float32)
            feat_sum[nt]["h_sum" + str(r)] = jax.random.normal(next(keys), (n, K, D), jnp.float32)

    review_feat_dic = {str(r): jax.random.normal(next(keys), (E, K, Dr), jnp.float32)
                       for r in rating_vals}
    prototypes_all = jax.random.normal(next(keys), (K, Dr), jnp.float32)

    params = {"conv": {}}
    for (u, e, v) in etypes:
        params["conv"][e] = {
            "W_rev": xavier_uniform(next(keys), (64 // num_factor, msg_units * num_factor)),
            "W_node": xavier_uniform(next(keys), (64 // num_factor, 64 // num_factor)),
        }
    params["ufc_w"] = xavier_uniform(next(keys), (out_units, msg_units))
    params["ifc_w"] = xavier_uniform(next(keys), (out_units, msg_units))
    b_bound = 1.0 / math.sqrt(msg_units)
    params["ufc_b"] = jax.random.uniform(next(keys), (out_units,), jnp.float32, -b_bound, b_bound)
    params["ifc_b"] = jax.random.uniform(next(keys), (out_units,), jnp.float32, -b_bound, b_bound)
    params["eta"] = xavier_uniform(next(keys), (rating_vals[-1], num_rating))

    ufeat, ifeat, int_dist = gcmc_layer_forward(
        cfg, graph, params, prototypes_all, review_feat_dic, feat_k, feat_sum)

    jax.block_until_ready((ufeat, ifeat, int_dist))
    assert ufeat.shape == (num_user, out_units)
    assert ifeat.shape == (num_movie, out_units)
    assert int_dist.shape == (E * len(rating_vals), 1)
    print("KERNEL_OK")
</pallas_src>

<mosaic_0001>
module attributes {stable_mosaic.version = 11 : i64} {
  func.func @_edge_weight_kernel(%arg0: i32, %arg1: i32, %arg2: memref<1x32x128xbf16, #tpu.memory_space<vmem>>, %arg3: memref<1x32x128xbf16, #tpu.memory_space<vmem>>, %arg4: memref<1x3x32x128xbf16, #tpu.memory_space<vmem>>, %arg5: memref<1x3x32x128xbf16, #tpu.memory_space<vmem>>, %arg6: memref<1x3x64x128xbf16, #tpu.memory_space<vmem>>, %arg7: memref<64x3xf32, #tpu.memory_space<vmem>>, %arg8: memref<1x1x128xf32, #tpu.memory_space<vmem>>, %arg9: memref<1x1x128xf32, #tpu.memory_space<vmem>>) attributes {dimension_semantics = [#tpu.dimension_semantics<parallel>, #tpu.dimension_semantics<parallel>], iteration_bounds = array<i64: 4, 1>, scalar_prefetch = 0 : i64, scratch_operands = 0 : i64, tpu.core_type = #tpu.core_type<tc>, window_params = [{transform_indices = @transform_0, window_bounds = array<i64: 1, 32, 128>}, {transform_indices = @transform_1, window_bounds = array<i64: 1, 32, 128>}, {transform_indices = @transform_2, window_bounds = array<i64: 1, 3, 32, 128>}, {transform_indices = @transform_3, window_bounds = array<i64: 1, 3, 32, 128>}, {transform_indices = @transform_4, window_bounds = array<i64: 1, 3, 64, 128>}, {pipeline_mode = #tpu.pipeline_mode<synchronous>, transform_indices = @transform_5, window_bounds = array<i64: 64, 3>}, {transform_indices = @transform_6, window_bounds = array<i64: 1, 1, 128>}, {transform_indices = @transform_7, window_bounds = array<i64: 1, 1, 128>}]} {
    %c0 = arith.constant 0 : index
    %c0_0 = arith.constant 0 : index
    %c0_1 = arith.constant 0 : index
    %0 = vector.load %arg2[%c0, %c0_0, %c0_1] : memref<1x32x128xbf16, #tpu.memory_space<vmem>>, vector<1x32x128xbf16>
    %1 = vector.shape_cast %0 : vector<1x32x128xbf16> to vector<32x128xbf16>
    %2 = arith.extf %1 : vector<32x128xbf16> to vector<32x128xf32>
    %c0_2 = arith.constant 0 : index
    %c0_3 = arith.constant 0 : index
    %c0_4 = arith.constant 0 : index
    %3 = vector.load %arg3[%c0_2, %c0_3, %c0_4] : memref<1x32x128xbf16, #tpu.memory_space<vmem>>, vector<1x32x128xbf16>
    %4 = vector.shape_cast %3 : vector<1x32x128xbf16> to vector<32x128xbf16>
    %5 = arith.extf %4 : vector<32x128xbf16> to vector<32x128xf32>
    %6 = arith.mulf %2, %2 : vector<32x128xf32>
    %cst = arith.constant dense<0.000000e+00> : vector<128xf32>
    %7 = vector.multi_reduction <add>, %6, %cst [0] : vector<32x128xf32> to vector<128xf32>
    %8 = vector.shape_cast %7 : vector<128xf32> to vector<1x128xf32>
    %cst_5 = arith.constant 1.000000e-24 : f32
    %9 = vector.broadcast %cst_5 : f32 to vector<1x128xf32>
    %10 = arith.maximumf %8, %9 : vector<1x128xf32>
    %11 = math.rsqrt %10 : vector<1x128xf32>
    %12 = arith.mulf %5, %5 : vector<32x128xf32>
    %cst_6 = arith.constant dense<0.000000e+00> : vector<128xf32>
    %13 = vector.multi_reduction <add>, %12, %cst_6 [0] : vector<32x128xf32> to vector<128xf32>
    %14 = vector.shape_cast %13 : vector<128xf32> to vector<1x128xf32>
    %cst_7 = arith.constant 1.000000e-24 : f32
    %15 = vector.broadcast %cst_7 : f32 to vector<1x128xf32>
    %16 = arith.maximumf %14, %15 : vector<1x128xf32>
    %17 = math.rsqrt %16 : vector<1x128xf32>
    %18 = arith.mulf %2, %5 : vector<32x128xf32>
    %cst_8 = arith.constant dense<0.000000e+00> : vector<128xf32>
    %19 = vector.multi_reduction <add>, %18, %cst_8 [0] : vector<32x128xf32> to vector<128xf32>
    %20 = vector.shape_cast %19 : vector<128xf32> to vector<1x128xf32>
    %21 = arith.mulf %20, %11 : vector<1x128xf32>
    %22 = arith.mulf %21, %17 : vector<1x128xf32>
    %cst_9 = arith.constant 2.000000e+00 : f32
    %23 = vector.broadcast %cst_9 : f32 to vector<1x128xf32>
    %24 = arith.mulf %22, %23 : vector<1x128xf32>
    %c0_10 = arith.constant 0 : index
    %c0_11 = arith.constant 0 : index
    %c0_12 = arith.constant 0 : index
    %c0_13 = arith.constant 0 : index
    %25 = vector.load %arg4[%c0_10, %c0_11, %c0_12, %c0_13] : memref<1x3x32x128xbf16, #tpu.memory_space<vmem>>, vector<1x1x32x128xbf16>
    %26 = vector.shape_cast %25 : vector<1x1x32x128xbf16> to vector<32x128xbf16>
    %27 = arith.extf %26 : vector<32x128xbf16> to vector<32x128xf32>
    %c0_14 = arith.constant 0 : index
    %c0_15 = arith.constant 0 : index
    %c0_16 = arith.constant 0 : index
    %c0_17 = arith.constant 0 : index
    %28 = vector.load %arg5[%c0_14, %c0_15, %c0_16, %c0_17] : memref<1x3x32x128xbf16, #tpu.memory_space<vmem>>, vector<1x1x32x128xbf16>
    %29 = vector.shape_cast %28 : vector<1x1x32x128xbf16> to vector<32x128xbf16>
    %30 = arith.extf %29 : vector<32x128xbf16> to vector<32x128xf32>
    %31 = arith.mulf %27, %30 : vector<32x128xf32>
    %cst_18 = arith.constant dense<0.000000e+00> : vector<128xf32>
    %32 = vector.multi_reduction <add>, %31, %cst_18 [0] : vector<32x128xf32> to vector<128xf32>
    %33 = vector.shape_cast %32 : vector<128xf32> to vector<1x128xf32>
    %cst_19 = arith.constant 2.000000e+00 : f32
    %34 = vector.broadcast %cst_19 : f32 to vector<1x128xf32>
    %35 = arith.mulf %33, %34 : vector<1x128xf32>
    %c0_20 = arith.constant 0 : index
    %c1 = arith.constant 1 : index
    %c0_21 = arith.constant 0 : index
    %c0_22 = arith.constant 0 : index
    %36 = vector.load %arg4[%c0_20, %c1, %c0_21, %c0_22] : memref<1x3x32x128xbf16, #tpu.memory_space<vmem>>, vector<1x1x32x128xbf16>
    %37 = vector.shape_cast %36 : vector<1x1x32x128xbf16> to vector<32x128xbf16>
    %38 = arith.extf %37 : vector<32x128xbf16> to vector<32x128xf32>
    %c0_23 = arith.constant 0 : index
    %c1_24 = arith.constant 1 : index
    %c0_25 = arith.constant 0 : index
    %c0_26 = arith.constant 0 : index
    %39 = vector.load %arg5[%c0_23, %c1_24, %c0_25, %c0_26] : memref<1x3x32x128xbf16, #tpu.memory_space<vmem>>, vector<1x1x32x128xbf16>
    %40 = vector.shape_cast %39 : vector<1x1x32x128xbf16> to vector<32x128xbf16>
    %41 = arith.extf %40 : vector<32x128xbf16> to vector<32x128xf32>
    %42 = arith.mulf %38, %41 : vector<32x128xf32>
    %cst_27 = arith.constant dense<0.000000e+00> : vector<128xf32>
    %43 = vector.multi_reduction <add>, %42, %cst_27 [0] : vector<32x128xf32> to vector<128xf32>
    %44 = vector.shape_cast %43 : vector<128xf32> to vector<1x128xf32>
    %cst_28 = arith.constant 2.000000e+00 : f32
    %45 = vector.broadcast %cst_28 : f32 to vector<1x128xf32>
    %46 = arith.mulf %44, %45 : vector<1x128xf32>
    %c0_29 = arith.constant 0 : index
    %c2 = arith.constant 2 : index
    %c0_30 = arith.constant 0 : index
    %c0_31 = arith.constant 0 : index
    %47 = vector.load %arg4[%c0_29, %c2, %c0_30, %c0_31] : memref<1x3x32x128xbf16, #tpu.memory_space<vmem>>, vector<1x1x32x128xbf16>
    %48 = vector.shape_cast %47 : vector<1x1x32x128xbf16> to vector<32x128xbf16>
    %49 = arith.extf %48 : vector<32x128xbf16> to vector<32x128xf32>
    %c0_32 = arith.constant 0 : index
    %c2_33 = arith.constant 2 : index
    %c0_34 = arith.constant 0 : index
    %c0_35 = arith.constant 0 : index
    %50 = vector.load %arg5[%c0_32, %c2_33, %c0_34, %c0_35] : memref<1x3x32x128xbf16, #tpu.memory_space<vmem>>, vector<1x1x32x128xbf16>
    %51 = vector.shape_cast %50 : vector<1x1x32x128xbf16> to vector<32x128xbf16>
    %52 = arith.extf %51 : vector<32x128xbf16> to vector<32x128xf32>
    %53 = arith.mulf %49, %52 : vector<32x128xf32>
    %cst_36 = arith.constant dense<0.000000e+00> : vector<128xf32>
    %54 = vector.multi_reduction <add>, %53, %cst_36 [0] : vector<32x128xf32> to vector<128xf32>
    %55 = vector.shape_cast %54 : vector<128xf32> to vector<1x128xf32>
    %cst_37 = arith.constant 2.000000e+00 : f32
    %56 = vector.broadcast %cst_37 : f32 to vector<1x128xf32>
    %57 = arith.mulf %55, %56 : vector<1x128xf32>
    %58 = arith.maximumf %24, %35 : vector<1x128xf32>
    %59 = arith.maximumf %58, %46 : vector<1x128xf32>
    %60 = arith.maximumf %59, %57 : vector<1x128xf32>
    %cst_38 = arith.constant 0.000000e+00 : f32
    %61 = vector.broadcast %cst_38 : f32 to vector<1x128xf32>
    %62 = arith.subf %35, %60 : vector<1x128xf32>
    %63 = math.exp %62 : vector<1x128xf32>
    %64 = arith.addf %61, %63 : vector<1x128xf32>
    %65 = arith.subf %46, %60 : vector<1x128xf32>
    %66 = math.exp %65 : vector<1x128xf32>
    %67 = arith.addf %64, %66 : vector<1x128xf32>
    %68 = arith.subf %57, %60 : vector<1x128xf32>
    %69 = math.exp %68 : vector<1x128xf32>
    %70 = arith.addf %67, %69 : vector<1x128xf32>
    %71 = arith.subf %24, %60 : vector<1x128xf32>
    %72 = math.exp %71 : vector<1x128xf32>
    %73 = arith.divf %72, %70 : vector<1x128xf32>
    %c0_39 = arith.constant 0 : index
    %c1_40 = arith.constant 1 : index
    %c0_41 = arith.constant 0 : index
    %c0_42 = arith.constant 0 : index
    %74 = vector.load %arg6[%c0_39, %c1_40, %c0_41, %c0_42] : memref<1x3x64x128xbf16, #tpu.memory_space<vmem>>, vector<1x1x64x128xbf16>
    %75 = vector.shape_cast %74 : vector<1x1x64x128xbf16> to vector<64x128xbf16>
    %76 = arith.extf %75 : vector<64x128xbf16> to vector<64x128xf32>
    %c0_43 = arith.constant 0 : index
    %c1_44 = arith.constant 1 : index
    %77 = vector.load %arg7[%c0_43, %c1_44] : memref<64x3xf32, #tpu.memory_space<vmem>>, vector<64x1xf32>
    %78 = vector.broadcast %77 : vector<64x1xf32> to vector<64x128xf32>
    %79 = arith.mulf %76, %78 : vector<64x128xf32>
    %cst_45 = arith.constant dense<0.000000e+00> : vector<128xf32>
    %80 = vector.multi_reduction <add>, %79, %cst_45 [0] : vector<64x128xf32> to vector<128xf32>
    %81 = vector.shape_cast %80 : vector<128xf32> to vector<1x128xf32>
    %cst_46 = arith.constant 2.000000e+00 : f32
    %82 = vector.broadcast %cst_46 : f32 to vector<1x128xf32>
    %83 = arith.mulf %81, %82 : vector<1x128xf32>
    %c0_47 = arith.constant 0 : index
    %c0_48 = arith.constant 0 : index
    %c0_49 = arith.constant 0 : index
    %c0_50 = arith.constant 0 : index
    %84 = vector.load %arg6[%c0_47, %c0_48, %c0_49, %c0_50] : memref<1x3x64x128xbf16, #tpu.memory_space<vmem>>, vector<1x1x64x128xbf16>
    %85 = vector.shape_cast %84 : vector<1x1x64x128xbf16> to vector<64x128xbf16>
    %86 = arith.extf %85 : vector<64x128xbf16> to vector<64x128xf32>
    %c0_51 = arith.constant 0 : index
    %c0_52 = arith.constant 0 : index
    %87 = vector.load %arg7[%c0_51, %c0_52] : memref<64x3xf32, #tpu.memory_space<vmem>>, vector<64x1xf32>
    %88 = vector.broadcast %87 : vector<64x1xf32> to vector<64x128xf32>
    %89 = arith.mulf %86, %88 : vector<64x128xf32>
    %cst_53 = arith.constant dense<0.000000e+00> : vector<128xf32>
    %90 = vector.multi_reduction <add>, %89, %cst_53 [0] : vector<64x128xf32> to vector<128xf32>
    %91 = vector.shape_cast %90 : vector<128xf32> to vector<1x128xf32>
    %cst_54 = arith.constant 2.000000e+00 : f32
    %92 = vector.broadcast %cst_54 : f32 to vector<1x128xf32>
    %93 = arith.mulf %91, %92 : vector<1x128xf32>
    %c0_55 = arith.constant 0 : index
    %c1_56 = arith.constant 1 : index
    %c0_57 = arith.constant 0 : index
    %c0_58 = arith.constant 0 : index
    %94 = vector.load %arg6[%c0_55, %c1_56, %c0_57, %c0_58] : memref<1x3x64x128xbf16, #tpu.memory_space<vmem>>, vector<1x1x64x128xbf16>
    %95 = vector.shape_cast %94 : vector<1x1x64x128xbf16> to vector<64x128xbf16>
    %96 = arith.extf %95 : vector<64x128xbf16> to vector<64x128xf32>
    %c0_59 = arith.constant 0 : index
    %c1_60 = arith.constant 1 : index
    %97 = vector.load %arg7[%c0_59, %c1_60] : memref<64x3xf32, #tpu.memory_space<vmem>>, vector<64x1xf32>
    %98 = vector.broadcast %97 : vector<64x1xf32> to vector<64x128xf32>
    %99 = arith.mulf %96, %98 : vector<64x128xf32>
    %cst_61 = arith.constant dense<0.000000e+00> : vector<128xf32>
    %100 = vector.multi_reduction <add>, %99, %cst_61 [0] : vector<64x128xf32> to vector<128xf32>
    %101 = vector.shape_cast %100 : vector<128xf32> to vector<1x128xf32>
    %cst_62 = arith.constant 2.000000e+00 : f32
    %102 = vector.broadcast %cst_62 : f32 to vector<1x128xf32>
    %103 = arith.mulf %101, %102 : vector<1x128xf32>
    %c0_63 = arith.constant 0 : index
    %c2_64 = arith.constant 2 : index
    %c0_65 = arith.constant 0 : index
    %c0_66 = arith.constant 0 : index
    %104 = vector.load %arg6[%c0_63, %c2_64, %c0_65, %c0_66] : memref<1x3x64x128xbf16, #tpu.memory_space<vmem>>, vector<1x1x64x128xbf16>
    %105 = vector.shape_cast %104 : vector<1x1x64x128xbf16> to vector<64x128xbf16>
    %106 = arith.extf %105 : vector<64x128xbf16> to vector<64x128xf32>
    %c0_67 = arith.constant 0 : index
    %c2_68 = arith.constant 2 : index
    %107 = vector.load %arg7[%c0_67, %c2_68] : memref<64x3xf32, #tpu.memory_space<vmem>>, vector<64x1xf32>
    %108 = vector.broadcast %107 : vector<64x1xf32> to vector<64x128xf32>
    %109 = arith.mulf %106, %108 : vector<64x128xf32>
    %cst_69 = arith.constant dense<0.000000e+00> : vector<128xf32>
    %110 = vector.multi_reduction <add>, %109, %cst_69 [0] : vector<64x128xf32> to vector<128xf32>
    %111 = vector.shape_cast %110 : vector<128xf32> to vector<1x128xf32>
    %cst_70 = arith.constant 2.000000e+00 : f32
    %112 = vector.broadcast %cst_70 : f32 to vector<1x128xf32>
    %113 = arith.mulf %111, %112 : vector<1x128xf32>
    %114 = arith.maximumf %83, %93 : vector<1x128xf32>
    %115 = arith.maximumf %114, %103 : vector<1x128xf32>
    %116 = arith.maximumf %115, %113 : vector<1x128xf32>
    %cst_71 = arith.constant 0.000000e+00 : f32
    %117 = vector.broadcast %cst_71 : f32 to vector<1x128xf32>
    %118 = arith.subf %93, %116 : vector<1x128xf32>
    %119 = math.exp %118 : vector<1x128xf32>
    %120 = arith.addf %117, %119 : vector<1x128xf32>
    %121 = arith.subf %103, %116 : vector<1x128xf32>
    %122 = math.exp %121 : vector<1x128xf32>
    %123 = arith.addf %120, %122 : vector<1x128xf32>
    %124 = arith.subf %113, %116 : vector<1x128xf32>
    %125 = math.exp %124 : vector<1x128xf32>
    %126 = arith.addf %123, %125 : vector<1x128xf32>
    %127 = arith.subf %83, %116 : vector<1x128xf32>
    %128 = math.exp %127 : vector<1x128xf32>
    %129 = arith.divf %128, %126 : vector<1x128xf32>
    %c0_72 = arith.constant 0 : index
    %c0_73 = arith.constant 0 : index
    %c0_74 = arith.constant 0 : index
    %130 = vector.load %arg8[%c0_72, %c0_73, %c0_74] : memref<1x1x128xf32, #tpu.memory_space<vmem>>, vector<1x1x128xf32>
    %131 = vector.shape_cast %130 : vector<1x1x128xf32> to vector<1x128xf32>
    %cst_75 = arith.constant 0.000000e+00 : f32
    %132 = vector.broadcast %cst_75 : f32 to vector<1x128xf32>
    %133 = arith.subf %132, %131 : vector<1x128xf32>
    %134 = math.exp %133 : vector<1x128xf32>
    %cst_76 = arith.constant 1.000000e+00 : f32
    %135 = vector.broadcast %cst_76 : f32 to vector<1x128xf32>
    %136 = arith.addf %135, %134 : vector<1x128xf32>
    %cst_77 = arith.constant 1.000000e+00 : f32
    %137 = vector.broadcast %cst_77 : f32 to vector<1x128xf32>
    %138 = arith.divf %137, %136 : vector<1x128xf32>
    %139 = arith.mulf %138, %129 : vector<1x128xf32>
    %cst_78 = arith.constant 1.000000e+00 : f32
    %140 = vector.broadcast %cst_78 : f32 to vector<1x128xf32>
    %141 = arith.subf %140, %138 : vector<1x128xf32>
    %142 = arith.mulf %141, %73 : vector<1x128xf32>
    %143 = arith.addf %139, %142 : vector<1x128xf32>
    %c0_79 = arith.constant 0 : index
    %c0_80 = arith.constant 0 : index
    %c0_81 = arith.constant 0 : index
    %144 = vector.load %arg9[%c0_79, %c0_80, %c0_81] : memref<1x1x128xf32, #tpu.memory_space<vmem>>, vector<1x1x128xf32>
    %145 = vector.shape_cast %144 : vector<1x1x128xf32> to vector<1x128xf32>
    %146 = vector.shape_cast %143 : vector<1x128xf32> to vector<1x1x128xf32>
    tpu.vector_store %arg9[%c0_79, %c0_80, %c0_81], %146 {strides = array<i32>} : memref<1x1x128xf32, #tpu.memory_space<vmem>>, vector<1x1x128xf32>,
    return
  }
  func.func @transform_0(%arg0: i32, %arg1: i32) -> (i32, i32, i32) {
    %c0_i32 = arith.constant 0 : i32
    %c0_i32_0 = arith.constant 0 : i32
    return %arg0, %c0_i32, %arg1 : i32, i32, i32
  }
  func.func @transform_1(%arg0: i32, %arg1: i32) -> (i32, i32, i32) {
    %c0_i32 = arith.constant 0 : i32
    %c0_i32_0 = arith.constant 0 : i32
    return %arg0, %c0_i32, %arg1 : i32, i32, i32
  }
  func.func @transform_2(%arg0: i32, %arg1: i32) -> (i32, i32, i32, i32) {
    %c0_i32 = arith.constant 0 : i32
    %c0_i32_0 = arith.constant 0 : i32
    %c0_i32_1 = arith.constant 0 : i32
    return %arg0, %c0_i32, %c0_i32_0, %arg1 : i32, i32, i32, i32
  }
  func.func @transform_3(%arg0: i32, %arg1: i32) -> (i32, i32, i32, i32) {
    %c0_i32 = arith.constant 0 : i32
    %c0_i32_0 = arith.constant 0 : i32
    %c0_i32_1 = arith.constant 0 : i32
    return %arg0, %c0_i32, %c0_i32_0, %arg1 : i32, i32, i32, i32
  }
  func.func @transform_4(%arg0: i32, %arg1: i32) -> (i32, i32, i32, i32) {
    %c0_i32 = arith.constant 0 : i32
    %c0_i32_0 = arith.constant 0 : i32
    %c0_i32_1 = arith.constant 0 : i32
    return %arg0, %c0_i32, %c0_i32_0, %arg1 : i32, i32, i32, i32
  }
  func.func @transform_5(%arg0: i32, %arg1: i32) -> (i32, i32) {
    %c0_i32 = arith.constant 0 : i32
    %c0_i32_0 = arith.constant 0 : i32
    %c0_i32_1 = arith.constant 0 : i32
    return %c0_i32, %c0_i32_0 : i32, i32
  }
  func.func @transform_6(%arg0: i32, %arg1: i32) -> (i32, i32, i32) {
    %c0_i32 = arith.constant 0 : i32
    %c0_i32_0 = arith.constant 0 : i32
    return %arg0, %c0_i32, %arg1 : i32, i32, i32
  }
  func.func @transform_7(%arg0: i32, %arg1: i32) -> (i32, i32, i32) {
    %c0_i32 = arith.constant 0 : i32
    %c0_i32_0 = arith.constant 0 : i32
    return %arg0, %c0_i32, %arg1 : i32, i32, i32
  }
}

</mosaic_0001>

<llo_original>
// kernel: tpu_custom_call.1
$region0: #{tpu_custom_call.1}
  #allocation0 [shape = 'u32[]', space=smem, size = 0x4, offset = 0x4, fixed_abs, tag = 'smem constant byte address 0x4 - core index']
  #allocation1 [shape = 'u32[144,128]{1,0:T(1,128)}', space=vmem, size = 0x12000, scoped, tag = 'internal scratch']
  %s0 = inlined_call_operand.vmem [shape: bf16[4,32,128], index: 0, kind: input, shape index: {}]
  %s1 = inlined_call_operand.hbm [shape: bf16[4,32,128], index: 1, kind: input, shape index: {}]
  %s2 = inlined_call_operand.hbm [shape: bf16[4,3,32,128], index: 2, kind: input, shape index: {}]
  %s3 = inlined_call_operand.hbm [shape: bf16[4,3,32,128], index: 3, kind: input, shape index: {}]
  %s4 = inlined_call_operand.hbm [shape: bf16[4,3,64,128], index: 4, kind: input, shape index: {}]
  %s5 = inlined_call_operand.vmem [shape: f32[64,3], index: 5, kind: input, shape index: {}]
  %s6 = inlined_call_operand.vmem [shape: f32[4,1,128], index: 6, kind: input, shape index: {}]
  %s7 = inlined_call_operand.hbm [shape: f32[4,1,128], index: 7, kind: output, shape index: {}]
  %s8 = sld [smem:[#allocation0]]
  $region77: #{tpu_custom_call.1} parent=0
    _
  %s10 = ssub.s32 1, %s8
  %s11 = scalar_select 0, %s10, %s8
  $region1: #{tpu_custom_call.1} parent=0
    #allocation2 [shape = 'u8[16384]{0}', space=vmem, size = 0x4000, scoped, tag = 'input window, operand 1']
    #allocation3 [shape = 's32[2]{0}', space=sflag, size = 0x8, scoped, tag = 'scoped memory for tpu_custom_call.1']
    #allocation4 [shape = 's32[2]{0}', space=sflag, size = 0x8, scoped, tag = 'scoped memory for tpu_custom_call.1']
    #allocation5 [shape = 'u8[49152]{0}', space=vmem, size = 0xc000, scoped, tag = 'input window, operand 2']
    #allocation6 [shape = 's32[2]{0}', space=sflag, size = 0x8, scoped, tag = 'scoped memory for tpu_custom_call.1']
    #allocation7 [shape = 'u8[49152]{0}', space=vmem, size = 0xc000, scoped, tag = 'input window, operand 3']
    #allocation8 [shape = 'u8[98304]{0}', space=vmem, size = 0x18000, scoped, tag = 'input window, operand 4']
    #allocation9 [shape = 's32[2]{0}', space=sflag, size = 0x8, scoped, tag = 'scoped memory for tpu_custom_call.1']
    #allocation10 [shape = 'u8[1024]{0}', space=vmem, size = 0x400, scoped, tag = 'output window, operand 0']
    %12 = vsyncpa [#allocation3], 0
    %s13 = scalar_lea.sflag [#allocation3], 1
    %14 = vsyncpa %s13, 0
    %15 = vsyncpa [#allocation6], 0
    %s16 = scalar_lea.sflag [#allocation6], 1
    %17 = vsyncpa %s16, 0
    %18 = vsyncpa [#allocation9], 0
    %s19 = scalar_lea.sflag [#allocation9], 1
    %20 = vsyncpa %s19, 0
    %21 = vsyncpa [#allocation4], 0
    %s22 = scalar_lea.sflag [#allocation4], 1
    %23 = vsyncpa %s22, 0
    loop: start=0, step=1, limit=6
    $region2: #{tpu_custom_call.1} parent=1 // loop_pre_header
      _
    $region3: #{tpu_custom_call.1} parent=1 // loop_header
      %s25 = sphi 0, %s29
      %p26 = scmp.ge.s32.totalorder %s25, 6
      %s32 = sphi 0, %s44
      %s33 = sphi 0, %s40
      %s34 = sphi 0, %s32
      %s35 = sphi 0, %s33
      %s36 = sphi 0, %s34
      %s37 = sphi 0, %s35
      %s49 = sphi 0, %s51
      %s52 = sphi 0, %s49
      %s53 = sphi 0, %s52
      %s69 = sphi 0, %s53
      %s77 = sphi 0, %s79
      %s80 = sphi 0, %s77
      %s81 = sphi 0, %s80
      %s97 = sphi 0, %s81
      %s105 = sphi 0, %s107
      %s108 = sphi 0, %s105
      %s109 = sphi 0, %s108
      %s125 = sphi 0, %s109
      %s133 = sphi 0, %s135
      %s136 = sphi 0, %s133
      %s137 = sphi 0, %s136
      %s153 = sphi 0, %s137
      %s161 = sphi 0, %s163
      %s164 = sphi 0, %s161
      %s165 = sphi 0, %s164
      %s181 = sphi 0, %s165
      %s185 = sphi 0, %s185
      %s187 = sphi 0, %s185
      %s188 = sphi 0, %s187
      %s202 = sphi 0, %s188
      %s210 = sphi 0, %s212
      %s213 = sphi 0, %s210
      %s214 = sphi 0, %s213
      %s230 = sphi 0, %s214
      %s238 = sphi 0, %s240
      %s241 = sphi 0, %s238
      %s242 = sphi 0, %s241
      %s258 = sphi 0, %s242
    $region4: #{tpu_custom_call.1} parent=1 // loop_header_branch
      %28 = sbr.rel (%p26) target = $region8
    $region5: #{tpu_custom_call.1} parent=1 // loop_body
      %s30 = ssub.s32 %s25, 1
      %s31 = ssub.s32 %s25, 2
      %s38 = sadd.s32 1, %s33
      %p39 = scmp.ge.s32.totalorder %s38, 1
      %s40 = scalar_select %p39, 0, %s38
      %s41 = sadd.s32 1, %s32
      %s42 = scalar_select %p39, %s41, %s32
      %p43 = scmp.ge.s32.totalorder %s42, 4
      %s44 = scalar_select %p43, 0, %s42
      %s45 = ssub.s32 %s32, %s44
      %s46 = ssub.s32 %s33, %s40
      %s47 = sor.u32 %s45, %s46
      %p48 = scmp.eq.s32.totalorder %s47, 0
      %s50 = sadd.s32 %s49, 1
      %s51 = scalar_select %p48, %s49, %s50
      %p54 = pneg %p48
      %p55 = scmp.eq.s32.totalorder %s25, 3
      %p56 = por %p54, %p55
      %p57 = scmp.ne.s32.totalorder %s49, %s52
      %p58 = scmp.eq.s32.totalorder %s25, 0
      %p59 = por %p57, %p58
      %p60 = scmp.ne.s32.totalorder %s49, %s52
      %p61 = scmp.eq.s32.totalorder %s30, 3
      %p62 = por %p60, %p61
      %p63 = scmp.ne.s32.totalorder %s52, %s53
      %p64 = scmp.eq.s32.totalorder %s30, 0
      %p65 = por %p63, %p64
      %p66 = scmp.ne.s32.totalorder %s52, %s53
      %p67 = scmp.eq.s32.totalorder %s31, 3
      %p68 = por %p66, %p67
      %p70 = scmp.ne.s32.totalorder %s53, %s69
      %p71 = scmp.eq.s32.totalorder %s31, 0
      %p72 = por %p70, %p71
      %s73 = ssub.s32 %s32, %s44
      %s74 = ssub.s32 %s33, %s40
      %s75 = sor.u32 %s73, %s74
      %p76 = scmp.eq.s32.totalorder %s75, 0
      %s78 = sadd.s32 %s77, 1
      %s79 = scalar_select %p76, %s77, %s78
      %p82 = pneg %p76
      %p83 = scmp.eq.s32.totalorder %s25, 3
      %p84 = por %p82, %p83
      %p85 = scmp.ne.s32.totalorder %s77, %s80
      %p86 = scmp.eq.s32.totalorder %s25, 0
      %p87 = por %p85, %p86
      %p88 = scmp.ne.s32.totalorder %s77, %s80
      %p89 = scmp.eq.s32.totalorder %s30, 3
      %p90 = por %p88, %p89
      %p91 = scmp.ne.s32.totalorder %s80, %s81
      %p92 = scmp.eq.s32.totalorder %s30, 0
      %p93 = por %p91, %p92
      %p94 = scmp.ne.s32.totalorder %s80, %s81
      %p95 = scmp.eq.s32.totalorder %s31, 3
      %p96 = por %p94, %p95
      %p98 = scmp.ne.s32.totalorder %s81, %s97
      %p99 = scmp.eq.s32.totalorder %s31, 0
      %p100 = por %p98, %p99
      %s101 = ssub.s32 %s32, %s44
      %s102 = ssub.s32 %s33, %s40
      %s103 = sor.u32 %s101, %s102
      %p104 = scmp.eq.s32.totalorder %s103, 0
      %s106 = sadd.s32 %s105, 1
      %s107 = scalar_select %p104, %s105, %s106
      %p110 = pneg %p104
      %p111 = scmp.eq.s32.totalorder %s25, 3
      %p112 = por %p110, %p111
      %p113 = scmp.ne.s32.totalorder %s105, %s108
      %p114 = scmp.eq.s32.totalorder %s25, 0
      %p115 = por %p113, %p114
      %p116 = scmp.ne.s32.totalorder %s105, %s108
      %p117 = scmp.eq.s32.totalorder %s30, 3
      %p118 = por %p116, %p117
      %p119 = scmp.ne.s32.totalorder %s108, %s109
      %p120 = scmp.eq.s32.totalorder %s30, 0
      %p121 = por %p119, %p120
      %p122 = scmp.ne.s32.totalorder %s108, %s109
      %p123 = scmp.eq.s32.totalorder %s31, 3
      %p124 = por %p122, %p123
      %p126 = scmp.ne.s32.totalorder %s109, %s125
      %p127 = scmp.eq.s32.totalorder %s31, 0
      %p128 = por %p126, %p127
      %s129 = ssub.s32 %s32, %s44
      %s130 = ssub.s32 %s33, %s40
      %s131 = sor.u32 %s129, %s130
      %p132 = scmp.eq.s32.totalorder %s131, 0
      %s134 = sadd.s32 %s133, 1
      %s135 = scalar_select %p132, %s133, %s134
      %p138 = pneg %p132
      %p139 = scmp.eq.s32.totalorder %s25, 3
      %p140 = por %p138, %p139
      %p141 = scmp.ne.s32.totalorder %s133, %s136
      %p142 = scmp.eq.s32.totalorder %s25, 0
      %p143 = por %p141, %p142
      %p144 = scmp.ne.s32.totalorder %s133, %s136
      %p145 = scmp.eq.s32.totalorder %s30, 3
      %p146 = por %p144, %p145
      %p147 = scmp.ne.s32.totalorder %s136, %s137
      %p148 = scmp.eq.s32.totalorder %s30, 0
      %p149 = por %p147, %p148
      %p150 = scmp.ne.s32.totalorder %s136, %s137
      %p151 = scmp.eq.s32.totalorder %s31, 3
      %p152 = por %p150, %p151
      %p154 = scmp.ne.s32.totalorder %s137, %s153
      %p155 = scmp.eq.s32.totalorder %s31, 0
      %p156 = por %p154, %p155
      %s157 = ssub.s32 %s32, %s44
      %s158 = ssub.s32 %s33, %s40
      %s159 = sor.u32 %s157, %s158
      %p160 = scmp.eq.s32.totalorder %s159, 0
      %s162 = sadd.s32 %s161, 1
      %s163 = scalar_select %p160, %s161, %s162
      %p166 = pneg %p160
      %p167 = scmp.eq.s32.totalorder %s25, 3
      %p168 = por %p166, %p167
      %p169 = scmp.ne.s32.totalorder %s161, %s164
      %p170 = scmp.eq.s32.totalorder %s25, 0
      %p171 = por %p169, %p170
      %p172 = scmp.ne.s32.totalorder %s161, %s164
      %p173 = scmp.eq.s32.totalorder %s30, 3
      %p174 = por %p172, %p173
      %p175 = scmp.ne.s32.totalorder %s164, %s165
      %p176 = scmp.eq.s32.totalorder %s30, 0
      %p177 = por %p175, %p176
      %p178 = scmp.ne.s32.totalorder %s164, %s165
      %p179 = scmp.eq.s32.totalorder %s31, 3
      %p180 = por %p178, %p179
      %p182 = scmp.ne.s32.totalorder %s165, %s181
      %p183 = scmp.eq.s32.totalorder %s31, 0
      %p184 = por %p182, %p183
      %s186 = sadd.s32 %s185, 1
      %p189 = scmp.eq.s32.totalorder %s25, 3
      %p190 = scmp.ne.s32.totalorder %s185, %s187
      %p191 = scmp.eq.s32.totalorder %s25, 0
      %p192 = por %p190, %p191
      %p193 = scmp.ne.s32.totalorder %s185, %s187
      %p194 = scmp.eq.s32.totalorder %s30, 3
      %p195 = por %p193, %p194
      %p196 = scmp.ne.s32.totalorder %s187, %s188
      %p197 = scmp.eq.s32.totalorder %s30, 0
      %p198 = por %p196, %p197
      %p199 = scmp.ne.s32.totalorder %s187, %s188
      %p200 = scmp.eq.s32.totalorder %s31, 3
      %p201 = por %p199, %p200
      %p203 = scmp.ne.s32.totalorder %s188, %s202
      %p204 = scmp.eq.s32.totalorder %s31, 0
      %p205 = por %p203, %p204
      %s206 = ssub.s32 %s32, %s44
      %s207 = ssub.s32 %s33, %s40
      %s208 = sor.u32 %s206, %s207
      %p209 = scmp.eq.s32.totalorder %s208, 0
      %s211 = sadd.s32 %s210, 1
      %s212 = scalar_select %p209, %s210, %s211
      %p215 = pneg %p209
      %p216 = scmp.eq.s32.totalorder %s25, 3
      %p217 = por %p215, %p216
      %p218 = scmp.ne.s32.totalorder %s210, %s213
      %p219 = scmp.eq.s32.totalorder %s25, 0
      %p220 = por %p218, %p219
      %p221 = scmp.ne.s32.totalorder %s210, %s213
      %p222 = scmp.eq.s32.totalorder %s30, 3
      %p223 = por %p221, %p222
      %p224 = scmp.ne.s32.totalorder %s213, %s214
      %p225 = scmp.eq.s32.totalorder %s30, 0
      %p226 = por %p224, %p225
      %p227 = scmp.ne.s32.totalorder %s213, %s214
      %p228 = scmp.eq.s32.totalorder %s31, 3
      %p229 = por %p227, %p228
      %p231 = scmp.ne.s32.totalorder %s214, %s230
      %p232 = scmp.eq.s32.totalorder %s31, 0
      %p233 = por %p231, %p232
      %s234 = ssub.s32 %s32, %s44
      %s235 = ssub.s32 %s33, %s40
      %s236 = sor.u32 %s234, %s235
      %p237 = scmp.eq.s32.totalorder %s236, 0
      %s239 = sadd.s32 %s238, 1
      %s240 = scalar_select %p237, %s238, %s239
      %p243 = pneg %p237
      %p244 = scmp.eq.s32.totalorder %s25, 3
      %p245 = por %p243, %p244
      %p246 = scmp.ne.s32.totalorder %s238, %s241
      %p247 = scmp.eq.s32.totalorder %s25, 0
      %p248 = por %p246, %p247
      %p249 = scmp.ne.s32.totalorder %s238, %s241
      %p250 = scmp.eq.s32.totalorder %s30, 3
      %p251 = por %p249, %p250
      %p252 = scmp.ne.s32.totalorder %s241, %s242
      %p253 = scmp.eq.s32.totalorder %s30, 0
      %p254 = por %p252, %p253
      %p255 = scmp.ne.s32.totalorder %s241, %s242
      %p256 = scmp.eq.s32.totalorder %s31, 3
      %p257 = por %p255, %p256
      %p259 = scmp.ne.s32.totalorder %s242, %s258
      %p260 = scmp.eq.s32.totalorder %s31, 0
      %p261 = por %p259, %p260
      %p262 = scmp.le.s32.totalorder 1, %s25
      %p263 = scmp.lt.s32.totalorder %s25, 5
      %p264 = pnand %p262, %p263
      %p265 = pneg %p264
      // Predicated region
      $region9: #{tpu_custom_call.1} parent=5 // pred_check
        _
      $region10: #{tpu_custom_call.1} parent=5 // pred_check_branch
        %267 = sbr.rel (%p264) target = $region12
      $region11: #{tpu_custom_call.1} parent=5 // pred_region
        %s268 = ssub.s32 %s25, 1
        // Predicated region
        $region13: #{tpu_custom_call.1} parent=11 // pred_check
          %p269 = pneg %p198
        $region14: #{tpu_custom_call.1} parent=11 // pred_check_branch
          %271 = sbr.rel (%p269) target = $region16
        $region15: #{tpu_custom_call.1} parent=11 // pred_region
          _
        $region16: #{tpu_custom_call.1} parent=11 // pred_fallthru
          _
      $region12: #{tpu_custom_call.1} parent=5 // pred_fallthru
        _
      %p272 = scmp.lt.s32.totalorder %s25, 4
      // Predicated region
      $region17: #{tpu_custom_call.1} parent=5 // pred_check
        %p273 = pneg %p272
      $region18: #{tpu_custom_call.1} parent=5 // pred_check_branch
        %275 = sbr.rel (%p273) target = $region20
      $region19: #{tpu_custom_call.1} parent=5 // pred_region
        // Predicated region
        $region21: #{tpu_custom_call.1} parent=19 // pred_check
          %p276 = pneg %p59
        $region22: #{tpu_custom_call.1} parent=19 // pred_check_branch
          %278 = sbr.rel (%p276) target = $region24
        $region23: #{tpu_custom_call.1} parent=19 // pred_region
          %p279 = scmp.lt.s32.totalorder %s32, 3
          %s280 = scalar_select %p279, %s32, 3
          %p281 = scmp.lt.s32.totalorder %s33, 0
          %s282 = scalar_select %p281, %s33, 0
          %s283 = smul.addr %s280, 4
          %s284 = sadd.s32 %s282, %s283
          %s285 = smul.addr %s284, 4
          %s286 = scalar_lea.vmem %s0, %s285
        $region24: #{tpu_custom_call.1} parent=19 // pred_fallthru
          _
        // Predicated region
        $region25: #{tpu_custom_call.1} parent=19 // pred_check
          %p287 = pneg %p87
        $region26: #{tpu_custom_call.1} parent=19 // pred_check_branch
          %289 = sbr.rel (%p287) target = $region28
        $region27: #{tpu_custom_call.1} parent=19 // pred_region
          %s290 = sand.u32 %s77, 1
          %s291 = scalar_lea.sflag [#allocation3], %s290
          %s292 = sand.u32 %s77, 1
          %s293 = smul.addr %s292, 16
          %s294 = scalar_lea.vmem [#allocation2], %s293
          %s296 = ssub.s32 256, 256
          %297 = vsyncadd %s291, %s296
          %s298 = smul.addr %s32, 4
          %s299 = sadd.s32 %s33, %s298
          %s300 = smul.addr %s299, 64
          %s301 = scalar_lea.hbm %s1, %s300
          %s302 = sshll.u32 %s294, 4
          %s303 = int_to_ptr.vmem [resolvable:$true] %s302
          %308 = dma.hbm_to_vmem [thread:$0]  %s301, 256, %s303, %s291, 64, 64, 4
        $region28: #{tpu_custom_call.1} parent=19 // pred_fallthru
          _
        // Predicated region
        $region29: #{tpu_custom_call.1} parent=19 // pred_check
          %p309 = pneg %p115
        $region30: #{tpu_custom_call.1} parent=19 // pred_check_branch
          %311 = sbr.rel (%p309) target = $region32
        $region31: #{tpu_custom_call.1} parent=19 // pred_region
          %s312 = sand.u32 %s25, 1
          %s313 = scalar_lea.sflag [#allocation6], %s312
          %s314 = sand.u32 %s105, 1
          %s315 = smul.addr %s314, 48
          %s316 = scalar_lea.vmem [#allocation5], %s315
          %s318 = ssub.s32 768, 768
          %319 = vsyncadd %s313, %s318
          %s320 = smul.addr %s32, 12
          %s321 = sadd.s32 %s33, %s320
          %s322 = smul.addr %s321, 64
          %s323 = scalar_lea.hbm %s2, %s322
          %s324 = sshll.u32 %s316, 4
          %s325 = int_to_ptr.vmem [resolvable:$true] %s324
          %330 = dma.hbm_to_vmem [thread:$0]  %s323, 768, %s325, %s313, 64, 64, 4
        $region32: #{tpu_custom_call.1} parent=19 // pred_fallthru
          _
        // Predicated region
        $region33: #{tpu_custom_call.1} parent=19 // pred_check
          %p331 = pneg %p143
        $region34: #{tpu_custom_call.1} parent=19 // pred_check_branch
          %333 = sbr.rel (%p331) target = $region36
        $region35: #{tpu_custom_call.1} parent=19 // pred_region
          %s334 = sand.u32 %s25, 1
          %s335 = scalar_lea.sflag [#allocation6], %s334
          %s336 = sand.u32 %s133, 1
          %s337 = smul.addr %s336, 48
          %s338 = scalar_lea.vmem [#allocation7], %s337
          %s340 = ssub.s32 768, 768
          %341 = vsyncadd %s335, %s340
          %s342 = smul.addr %s32, 12
          %s343 = sadd.s32 %s33, %s342
          %s344 = smul.addr %s343, 64
          %s345 = scalar_lea.hbm %s3, %s344
          %s346 = sshll.u32 %s338, 4
          %s347 = int_to_ptr.vmem [resolvable:$true] %s346
          %352 = dma.hbm_to_vmem [thread:$0]  %s345, 768, %s347, %s335, 64, 64, 4
        $region36: #{tpu_custom_call.1} parent=19 // pred_fallthru
          _
        // Predicated region
        $region37: #{tpu_custom_call.1} parent=19 // pred_check
          %p353 = pneg %p171
        $region38: #{tpu_custom_call.1} parent=19 // pred_check_branch
          %355 = sbr.rel (%p353) target = $region40
        $region39: #{tpu_custom_call.1} parent=19 // pred_region
          %s356 = sand.u32 %s161, 1
          %s357 = scalar_lea.sflag [#allocation9], %s356
          %s358 = sand.u32 %s161, 1
          %s359 = smul.addr %s358, 96
          %s360 = scalar_lea.vmem [#allocation8], %s359
          %s362 = ssub.s32 1536, 1536
          %363 = vsyncadd %s357, %s362
          %s364 = smul.addr %s32, 24
          %s365 = sadd.s32 %s33, %s364
          %s366 = smul.addr %s365, 64
          %s367 = scalar_lea.hbm %s4, %s366
          %s368 = sshll.u32 %s360, 4
          %s369 = int_to_ptr.vmem [resolvable:$true] %s368
          %374 = dma.hbm_to_vmem [thread:$0]  %s367, 1536, %s369, %s357, 64, 64, 4
        $region40: #{tpu_custom_call.1} parent=19 // pred_fallthru
          _
        // Predicated region
        $region41: #{tpu_custom_call.1} parent=19 // pred_check
          %p375 = pneg %p220
        $region42: #{tpu_custom_call.1} parent=19 // pred_check_branch
          %377 = sbr.rel (%p375) target = $region44
        $region43: #{tpu_custom_call.1} parent=19 // pred_region
          %p378 = scmp.lt.s32.totalorder %s32, 3
          %s379 = scalar_select %p378, %s32, 3
          %p380 = scmp.lt.s32.totalorder %s33, 0
          %s381 = scalar_select %p380, %s33, 0
          %s382 = sadd.s32 %s381, %s379
          %s383 = scalar_lea.vmem %s6, %s382
        $region44: #{tpu_custom_call.1} parent=19 // pred_fallthru
          _
      $region20: #{tpu_custom_call.1} parent=5 // pred_fallthru
        _
      %p384 = scmp.le.s32.totalorder 1, %s25
      %p385 = scmp.lt.s32.totalorder %s25, 5
      %p386 = pnand %p384, %p385
      %p387 = pneg %p386
      // Predicated region
      $region45: #{tpu_custom_call.1} parent=5 // pred_check
        _
      $region46: #{tpu_custom_call.1} parent=5 // pred_check_branch
        %389 = sbr.rel (%p386) target = $region48
      $region47: #{tpu_custom_call.1} parent=5 // pred_region
        %s390 = ssub.s32 %s25, 1
        %s391 = sand.u32 %s80, 1
        %s392 = scalar_lea.sflag [#allocation3], %s391
        %s393 = sand.u32 %s80, 1
        %s394 = smul.addr %s393, 16
        %s395 = scalar_lea.vmem [#allocation2], %s394
        // Predicated region
        $region49: #{tpu_custom_call.1} parent=47 // pred_check
          %p396 = pneg %p93
        $region50: #{tpu_custom_call.1} parent=47 // pred_check_branch
          %398 = sbr.rel (%p396) target = $region52
        $region51: #{tpu_custom_call.1} parent=47 // pred_region
          %399 = dma.done %s392, 256
        $region52: #{tpu_custom_call.1} parent=47 // pred_fallthru
          _
        %s400 = sand.u32 %s30, 1
        %s401 = scalar_lea.sflag [#allocation6], %s400
        %s402 = sand.u32 %s108, 1
        %s403 = smul.addr %s402, 48
        %s404 = scalar_lea.vmem [#allocation5], %s403
        // Predicated region
        $region53: #{tpu_custom_call.1} parent=47 // pred_check
          %p405 = pneg %p121
        $region54: #{tpu_custom_call.1} parent=47 // pred_check_branch
          %407 = sbr.rel (%p405) target = $region56
        $region55: #{tpu_custom_call.1} parent=47 // pred_region
          %408 = dma.done %s401, 768
        $region56: #{tpu_custom_call.1} parent=47 // pred_fallthru
          _
        %s409 = sand.u32 %s30, 1
        %s410 = scalar_lea.sflag [#allocation6], %s409
        %s411 = sand.u32 %s136, 1
        %s412 = smul.addr %s411, 48
        %s413 = scalar_lea.vmem [#allocation7], %s412
        // Predicated region
        $region57: #{tpu_custom_call.1} parent=47 // pred_check
          %p414 = pneg %p149
        $region58: #{tpu_custom_call.1} parent=47 // pred_check_branch
          %416 = sbr.rel (%p414) target = $region60
        $region59: #{tpu_custom_call.1} parent=47 // pred_region
          %417 = dma.done %s410, 768
        $region60: #{tpu_custom_call.1} parent=47 // pred_fallthru
          _
        %s418 = sand.u32 %s164, 1
        %s419 = scalar_lea.sflag [#allocation9], %s418
        %s420 = sand.u32 %s164, 1
        %s421 = smul.addr %s420, 96
        %s422 = scalar_lea.vmem [#allocation8], %s421
        // Predicated region
        $region61: #{tpu_custom_call.1} parent=47 // pred_check
          %p423 = pneg %p177
        $region62: #{tpu_custom_call.1} parent=47 // pred_check_branch
          %425 = sbr.rel (%p423) target = $region64
        $region63: #{tpu_custom_call.1} parent=47 // pred_region
          %426 = dma.done %s419, 1536
        $region64: #{tpu_custom_call.1} parent=47 // pred_fallthru
          _
        %p427 = scmp.lt.s32.totalorder %s34, 3
        %s428 = scalar_select %p427, %s34, 3
        %p429 = scmp.lt.s32.totalorder %s35, 0
        %s430 = scalar_select %p429, %s35, 0
        %s431 = smul.addr %s428, 4
        %s432 = sadd.s32 %s430, %s431
        %s433 = smul.addr %s432, 4
        %s434 = scalar_lea.vmem %s0, %s433
        %p435 = pneg %p65
        %p436 = pneg %p62
        %s437 = sand.u32 %s80, 1
        %s438 = scalar_lea.sflag [#allocation3], %s437
        %s439 = sand.u32 %s80, 1
        %s440 = smul.addr %s439, 16
        %s441 = scalar_lea.vmem [#allocation2], %s440
        %p442 = pneg %p93
        %p443 = pneg %p90
        %s444 = sand.u32 %s30, 1
        %s445 = scalar_lea.sflag [#allocation6], %s444
        %s446 = sand.u32 %s108, 1
        %s447 = smul.addr %s446, 48
        %s448 = scalar_lea.vmem [#allocation5], %s447
        %p449 = pneg %p121
        %p450 = pneg %p118
        %s451 = sand.u32 %s30, 1
        %s452 = scalar_lea.sflag [#allocation6], %s451
        %s453 = sand.u32 %s136, 1
        %s454 = smul.addr %s453, 48
        %s455 = scalar_lea.vmem [#allocation7], %s454
        %p456 = pneg %p149
        %p457 = pneg %p146
        %s458 = sand.u32 %s164, 1
        %s459 = scalar_lea.sflag [#allocation9], %s458
        %s460 = sand.u32 %s164, 1
        %s461 = smul.addr %s460, 96
        %s462 = scalar_lea.vmem [#allocation8], %s461
        %p463 = pneg %p177
        %p464 = pneg %p174
        %p465 = pneg %p198
        %p466 = pneg %p195
        %p467 = scmp.lt.s32.totalorder %s34, 3
        %s468 = scalar_select %p467, %s34, 3
        %p469 = scmp.lt.s32.totalorder %s35, 0
        %s470 = scalar_select %p469, %s35, 0
        %s471 = sadd.s32 %s470, %s468
        %s472 = scalar_lea.vmem %s6, %s471
        %p473 = pneg %p226
        %p474 = pneg %p223
        %p475 = pneg %p254
        %p476 = pneg %p251
        %s477 = sand.u32 %s241, 1
        %s478 = scalar_lea.sflag [#allocation4], %s477
        %s479 = sand.u32 %s241, 1
        %s480 = scalar_lea.vmem [#allocation10], %s479
        %p481 = scmp.lt.s32.totalorder %s34, 3
        %s482 = scalar_select %p481, %s34, 3
        %p483 = scmp.lt.s32.totalorder %s35, 0
        %s484 = scalar_select %p483, %s35, 0
        %s485 = smul.addr %s482, 4
        %s486 = sadd.s32 %s484, %s485
        %s487 = smul.addr %s486, 4
        %s488 = scalar_lea.vmem %s0, %s487
        %p489 = scmp.lt.s32.totalorder %s34, 3
        %s490 = scalar_select %p489, %s34, 3
        %p491 = scmp.lt.s32.totalorder %s35, 0
        %s492 = scalar_select %p491, %s35, 0
        %s493 = sadd.s32 %s492, %s490
        %s494 = scalar_lea.vmem %s6, %s493
        %v495 = vld [vmem:[%s488] sm:$0xf]
        %v496 = vld [vmem:[%s488 + $0x4] sm:$0xf]
        %v497 = vld [vmem:[%s488 + $0x8] sm:$0xf]
        %v498 = vld [vmem:[%s488 + $0xc] sm:$0xf]
        %v499 = vunpack.c.l.bf16 %v495
        %v500 = vunpack.c.l.bf16 %v496
        %v501 = vunpack.c.l.bf16 %v497
        %v502 = vunpack.c.l.bf16 %v498
        %v503 = vld [vmem:[%s395] sm:$0xf]
        %v504 = vld [vmem:[%s395 + $0x4] sm:$0xf]
        %v505 = vld [vmem:[%s395 + $0x8] sm:$0xf]
        %v506 = vld [vmem:[%s395 + $0xc] sm:$0xf]
        %v507 = vunpack.c.l.bf16 %v503
        %v508 = vunpack.c.l.bf16 %v504
        %v509 = vunpack.c.l.bf16 %v505
        %v510 = vunpack.c.l.bf16 %v506
        %v511 = vmul.f32 %v499, %v499
        %v512 = vmul.f32 %v500, %v500
        %v513 = vmul.f32 %v501, %v501
        %v514 = vmul.f32 %v502, %v502
        %v515 = vadd.f32 %v511, %v512
        %v516 = vadd.f32 %v515, %v513
        %v517 = vadd.f32 %v516, %v514
        %v518 = vrot.slane %v517, 4
        %v519 = vadd.f32 %v517, %v518
        %v520 = vrot.slane %v519, 2
        %v521 = vadd.f32 %v519, %v520
        %v522 = vrot.slane %v521, 1
        %v523 = vadd.f32 %v521, %v522
        %v524 = vmax.f32 %v523, 1e-24
        %v525 = vrsqrt.pop %v524
        %v526 = vmul.f32 %v507, %v507
        %v527 = vmul.f32 %v508, %v508
        %v528 = vmul.f32 %v509, %v509
        %v529 = vmul.f32 %v510, %v510
        %v530 = vadd.f32 %v526, %v527
        %v531 = vadd.f32 %v530, %v528
        %v532 = vadd.f32 %v531, %v529
        %v533 = vrot.slane %v532, 4
        %v534 = vadd.f32 %v532, %v533
        %v535 = vrot.slane %v534, 2
        %v536 = vadd.f32 %v534, %v535
        %v537 = vrot.slane %v536, 1
        %v538 = vadd.f32 %v536, %v537
        %v539 = vmax.f32 %v538, 1e-24
        %v540 = vrsqrt.pop %v539
        %v541 = vmul.f32 %v499, %v507
        %v542 = vmul.f32 %v500, %v508
        %v543 = vmul.f32 %v501, %v509
        %v544 = vmul.f32 %v502, %v510
        %v545 = vadd.f32 %v541, %v542
        %v546 = vadd.f32 %v545, %v543
        %v547 = vadd.f32 %v546, %v544
        %v548 = vrot.slane %v547, 4
        %v549 = vadd.f32 %v547, %v548
        %v550 = vrot.slane %v549, 2
        %v551 = vadd.f32 %v549, %v550
        %v552 = vrot.slane %v551, 1
        %v553 = vadd.f32 %v551, %v552
        %v554 = vmul.f32 %v553, %v525
        %v555 = vmul.f32 %v554, %v540
        %v556 = vmul.f32 %v555, 2.0
        %v557 = vld [vmem:[%s404] sm:$0xf]
        %v558 = vld [vmem:[%s404 + $0x4] sm:$0xf]
        %v559 = vld [vmem:[%s404 + $0x8] sm:$0xf]
        %v560 = vld [vmem:[%s404 + $0xc] sm:$0xf]
        %v561 = vunpack.c.l.bf16 %v557
        %v562 = vunpack.c.l.bf16 %v558
        %v563 = vunpack.c.l.bf16 %v559
        %v564 = vunpack.c.l.bf16 %v560
        %v565 = vld [vmem:[%s413] sm:$0xf]
        %v566 = vld [vmem:[%s413 + $0x4] sm:$0xf]
        %v567 = vld [vmem:[%s413 + $0x8] sm:$0xf]
        %v568 = vld [vmem:[%s413 + $0xc] sm:$0xf]
        %v569 = vunpack.c.l.bf16 %v565
        %v570 = vunpack.c.l.bf16 %v566
        %v571 = vunpack.c.l.bf16 %v567
        %v572 = vunpack.c.l.bf16 %v568
        %v573 = vmul.f32 %v561, %v569
        %v574 = vmul.f32 %v562, %v570
        %v575 = vmul.f32 %v563, %v571
        %v576 = vmul.f32 %v564, %v572
        %v577 = vadd.f32 %v573, %v574
        %v578 = vadd.f32 %v577, %v575
        %v579 = vadd.f32 %v578, %v576
        %v580 = vrot.slane %v579, 4
        %v581 = vadd.f32 %v579, %v580
        %v582 = vrot.slane %v581, 2
        %v583 = vadd.f32 %v581, %v582
        %v584 = vrot.slane %v583, 1
        %v585 = vadd.f32 %v583, %v584
        %v586 = vmul.f32 %v585, 2.0
        %s587 = scalar_lea.vmem %s404, 16 [#allocation5]
        %v588 = vld [vmem:[%s587] sm:$0xf]
        %v589 = vld [vmem:[%s587 + $0x4] sm:$0xf]
        %v590 = vld [vmem:[%s587 + $0x8] sm:$0xf]
        %v591 = vld [vmem:[%s587 + $0xc] sm:$0xf]
        %v592 = vunpack.c.l.bf16 %v588
        %v593 = vunpack.c.l.bf16 %v589
        %v594 = vunpack.c.l.bf16 %v590
        %v595 = vunpack.c.l.bf16 %v591
        %s596 = scalar_lea.vmem %s413, 16 [#allocation7]
        %v597 = vld [vmem:[%s596] sm:$0xf]
        %v598 = vld [vmem:[%s596 + $0x4] sm:$0xf]
        %v599 = vld [vmem:[%s596 + $0x8] sm:$0xf]
        %v600 = vld [vmem:[%s596 + $0xc] sm:$0xf]
        %v601 = vunpack.c.l.bf16 %v597
        %v602 = vunpack.c.l.bf16 %v598
        %v603 = vunpack.c.l.bf16 %v599
        %v604 = vunpack.c.l.bf16 %v600
        %v605 = vmul.f32 %v592, %v601
        %v606 = vmul.f32 %v593, %v602
        %v607 = vmul.f32 %v594, %v603
        %v608 = vmul.f32 %v595, %v604
        %v609 = vadd.f32 %v605, %v606
        %v610 = vadd.f32 %v609, %v607
        %v611 = vadd.f32 %v610, %v608
        %v612 = vrot.slane %v611, 4
        %v613 = vadd.f32 %v611, %v612
        %v614 = vrot.slane %v613, 2
        %v615 = vadd.f32 %v613, %v614
        %v616 = vrot.slane %v615, 1
        %v617 = vadd.f32 %v615, %v616
        %v618 = vmul.f32 %v617, 2.0
        %s619 = scalar_lea.vmem %s404, 32 [#allocation5]
        %v620 = vld [vmem:[%s619] sm:$0xf]
        %v621 = vld [vmem:[%s619 + $0x4] sm:$0xf]
        %v622 = vld [vmem:[%s619 + $0x8] sm:$0xf]
        %v623 = vld [vmem:[%s619 + $0xc] sm:$0xf]
        %v624 = vunpack.c.l.bf16 %v620
        %v625 = vunpack.c.l.bf16 %v621
        %v626 = vunpack.c.l.bf16 %v622
        %v627 = vunpack.c.l.bf16 %v623
        %s628 = scalar_lea.vmem %s413, 32 [#allocation7]
        %v629 = vld [vmem:[%s628] sm:$0xf]
        %v630 = vld [vmem:[%s628 + $0x4] sm:$0xf]
        %v631 = vld [vmem:[%s628 + $0x8] sm:$0xf]
        %v632 = vld [vmem:[%s628 + $0xc] sm:$0xf]
        %v633 = vunpack.c.l.bf16 %v629
        %v634 = vunpack.c.l.bf16 %v630
        %v635 = vunpack.c.l.bf16 %v631
        %v636 = vunpack.c.l.bf16 %v632
        %v637 = vmul.f32 %v624, %v633
        %v638 = vmul.f32 %v625, %v634
        %v639 = vmul.f32 %v626, %v635
        %v640 = vmul.f32 %v627, %v636
        %v641 = vadd.f32 %v637, %v638
        %v642 = vadd.f32 %v641, %v639
        %v643 = vadd.f32 %v642, %v640
        %v644 = vrot.slane %v643, 4
        %v645 = vadd.f32 %v643, %v644
        %v646 = vrot.slane %v645, 2
        %v647 = vadd.f32 %v645, %v646
        %v648 = vrot.slane %v647, 1
        %v649 = vadd.f32 %v647, %v648
        %v650 = vmul.f32 %v649, 2.0
        %v651 = vmax.f32 %v556, %v586
        %v652 = vmax.f32 %v651, %v618
        %v653 = vmax.f32 %v652, %v650
        %v654 = vsub.f32 %v586, %v653
        %v655 = vmul.f32 %v654, 1.442695
        %v656 = vpow.pop %v655
        %v657 = vadd.f32 %v656, 0.0
        %v658 = vsub.f32 %v618, %v653
        %v659 = vmul.f32 %v658, 1.442695
        %v660 = vpow.pop %v659
        %v661 = vadd.f32 %v657, %v660
        %v662 = vsub.f32 %v650, %v653
        %v663 = vmul.f32 %v662, 1.442695
        %v664 = vpow.pop %v663
        %v665 = vadd.f32 %v661, %v664
        %v666 = vsub.f32 %v556, %v653
        %v667 = vmul.f32 %v666, 1.442695
        %v668 = vpow.pop %v667
        %v669 = vrcp.pop %v665
        %v670 = vmul.f32 %v668, %v669
        %s671 = scalar_lea.vmem %s422, 32 [#allocation8]
        %v672 = vld [vmem:[%s671] sm:$0xf]
        %v673 = vld [vmem:[%s671 + $0x4] sm:$0xf]
        %v674 = vld [vmem:[%s671 + $0x8] sm:$0xf]
        %v675 = vld [vmem:[%s671 + $0xc] sm:$0xf]
        %v676 = vld [vmem:[%s671 + $0x10] sm:$0xf]
        %v677 = vld [vmem:[%s671 + $0x14] sm:$0xf]
        %v678 = vld [vmem:[%s671 + $0x18] sm:$0xf]
        %v679 = vld [vmem:[%s671 + $0x1c] sm:$0xf]
        %v680 = vunpack.c.l.bf16 %v672
        %v681 = vunpack.c.l.bf16 %v673
        %v682 = vunpack.c.l.bf16 %v674
        %v683 = vunpack.c.l.bf16 %v675
        %v684 = vunpack.c.l.bf16 %v676
        %v685 = vunpack.c.l.bf16 %v677
        %v686 = vunpack.c.l.bf16 %v678
        %v687 = vunpack.c.l.bf16 %v679
        %v688 = vld [vmem:[%s5] sm:$0xff]
        %v689 = vld [vmem:[%s5 + $0x8] sm:$0xff]
        %v690 = vld [vmem:[%s5 + $0x10] sm:$0xff]
        %v691 = vld [vmem:[%s5 + $0x18] sm:$0xff]
        %v692 = vld [vmem:[%s5 + $0x20] sm:$0xff]
        %v693 = vld [vmem:[%s5 + $0x28] sm:$0xff]
        %v694 = vld [vmem:[%s5 + $0x30] sm:$0xff]
        %v695 = vld [vmem:[%s5 + $0x38] sm:$0xff]
        %697 = vset.pattern.permute.xlu0 1
        %698 = vperm.xlu0 %697, %v688
        %v699 = vpop.permute.xlu0 %698
        %702 = vset.pattern.permute.xlu0 1
        %703 = vperm.xlu0 %702, %v689
        %v704 = vpop.permute.xlu0 %703
        %707 = vset.pattern.permute.xlu0 1
        %708 = vperm.xlu0 %707, %v690
        %v709 = vpop.permute.xlu0 %708
        %712 = vset.pattern.permute.xlu0 1
        %713 = vperm.xlu0 %712, %v691
        %v714 = vpop.permute.xlu0 %713
        %717 = vset.pattern.permute.xlu0 1
        %718 = vperm.xlu0 %717, %v692
        %v719 = vpop.permute.xlu0 %718
        %722 = vset.pattern.permute.xlu0 1
        %723 = vperm.xlu0 %722, %v693
        %v724 = vpop.permute.xlu0 %723
        %727 = vset.pattern.permute.xlu0 1
        %728 = vperm.xlu0 %727, %v694
        %v729 = vpop.permute.xlu0 %728
        %732 = vset.pattern.permute.xlu0 1
        %733 = vperm.xlu0 %732, %v695
        %v734 = vpop.permute.xlu0 %733
        %v736 = vmul.f32 %v680, %v699
        %v737 = vmul.f32 %v681, %v704
        %v738 = vmul.f32 %v682, %v709
        %v739 = vmul.f32 %v683, %v714
        %v740 = vmul.f32 %v684, %v719
        %v741 = vmul.f32 %v685, %v724
        %v742 = vmul.f32 %v686, %v729
        %v743 = vmul.f32 %v687, %v734
        %v744 = vadd.f32 %v736, %v737
        %v745 = vadd.f32 %v744, %v738
        %v746 = vadd.f32 %v745, %v739
        %v747 = vadd.f32 %v746, %v740
        %v748 = vadd.f32 %v747, %v741
        %v749 = vadd.f32 %v748, %v742
        %v750 = vadd.f32 %v749, %v743
        %v751 = vrot.slane %v750, 4
        %v752 = vadd.f32 %v750, %v751
        %v753 = vrot.slane %v752, 2
        %v754 = vadd.f32 %v752, %v753
        %v755 = vrot.slane %v754, 1
        %v756 = vadd.f32 %v754, %v755
        %v757 = vmul.f32 %v756, 2.0
        %v758 = vld [vmem:[%s422] sm:$0xf]
        %v759 = vld [vmem:[%s422 + $0x4] sm:$0xf]
        %v760 = vld [vmem:[%s422 + $0x8] sm:$0xf]
        %v761 = vld [vmem:[%s422 + $0xc] sm:$0xf]
        %v762 = vld [vmem:[%s422 + $0x10] sm:$0xf]
        %v763 = vld [vmem:[%s422 + $0x14] sm:$0xf]
        %v764 = vld [vmem:[%s422 + $0x18] sm:$0xf]
        %v765 = vld [vmem:[%s422 + $0x1c] sm:$0xf]
        %v766 = vunpack.c.l.bf16 %v758
        %v767 = vunpack.c.l.bf16 %v759
        %v768 = vunpack.c.l.bf16 %v760
        %v769 = vunpack.c.l.bf16 %v761
        %v770 = vunpack.c.l.bf16 %v762
        %v771 = vunpack.c.l.bf16 %v763
        %v772 = vunpack.c.l.bf16 %v764
        %v773 = vunpack.c.l.bf16 %v765
        %774 = vset.pattern.permute.xlu0 0
        %775 = vperm.xlu0 %774, %v688
        %v776 = vpop.permute.xlu0 %775
        %778 = vset.pattern.permute.xlu0 0
        %779 = vperm.xlu0 %778, %v689
        %v780 = vpop.permute.xlu0 %779
        %782 = vset.pattern.permute.xlu0 0
        %783 = vperm.xlu0 %782, %v690
        %v784 = vpop.permute.xlu0 %783
        %786 = vset.pattern.permute.xlu0 0
        %787 = vperm.xlu0 %786, %v691
        %v788 = vpop.permute.xlu0 %787
        %790 = vset.pattern.permute.xlu0 0
        %791 = vperm.xlu0 %790, %v692
        %v792 = vpop.permute.xlu0 %791
        %794 = vset.pattern.permute.xlu0 0
        %795 = vperm.xlu0 %794, %v693
        %v796 = vpop.permute.xlu0 %795
        %798 = vset.pattern.permute.xlu0 0
        %799 = vperm.xlu0 %798, %v694
        %v800 = vpop.permute.xlu0 %799
        %802 = vset.pattern.permute.xlu0 0
        %803 = vperm.xlu0 %802, %v695
        %v804 = vpop.permute.xlu0 %803
        %v806 = vmul.f32 %v766, %v776
        %v807 = vmul.f32 %v767, %v780
        %v808 = vmul.f32 %v768, %v784
        %v809 = vmul.f32 %v769, %v788
        %v810 = vmul.f32 %v770, %v792
        %v811 = vmul.f32 %v771, %v796
        %v812 = vmul.f32 %v772, %v800
        %v813 = vmul.f32 %v773, %v804
        %v814 = vadd.f32 %v806, %v807
        %v815 = vadd.f32 %v814, %v808
        %v816 = vadd.f32 %v815, %v809
        %v817 = vadd.f32 %v816, %v810
        %v818 = vadd.f32 %v817, %v811
        %v819 = vadd.f32 %v818, %v812
        %v820 = vadd.f32 %v819, %v813
        %v821 = vrot.slane %v820, 4
        %v822 = vadd.f32 %v820, %v821
        %v823 = vrot.slane %v822, 2
        %v824 = vadd.f32 %v822, %v823
        %v825 = vrot.slane %v824, 1
        %v826 = vadd.f32 %v824, %v825
        %v827 = vmul.f32 %v826, 2.0
        %s828 = scalar_lea.vmem %s422, 64 [#allocation8]
        %v829 = vld [vmem:[%s828] sm:$0xf]
        %v830 = vld [vmem:[%s828 + $0x4] sm:$0xf]
        %v831 = vld [vmem:[%s828 + $0x8] sm:$0xf]
        %v832 = vld [vmem:[%s828 + $0xc] sm:$0xf]
        %v833 = vld [vmem:[%s828 + $0x10] sm:$0xf]
        %v834 = vld [vmem:[%s828 + $0x14] sm:$0xf]
        %v835 = vld [vmem:[%s828 + $0x18] sm:$0xf]
        %v836 = vld [vmem:[%s828 + $0x1c] sm:$0xf]
        %v837 = vunpack.c.l.bf16 %v829
        %v838 = vunpack.c.l.bf16 %v830
        %v839 = vunpack.c.l.bf16 %v831
        %v840 = vunpack.c.l.bf16 %v832
        %v841 = vunpack.c.l.bf16 %v833
        %v842 = vunpack.c.l.bf16 %v834
        %v843 = vunpack.c.l.bf16 %v835
        %v844 = vunpack.c.l.bf16 %v836
        %845 = vset.pattern.permute.xlu0 2
        %846 = vperm.xlu0 %845, %v688
        %v847 = vpop.permute.xlu0 %846
        %849 = vset.pattern.permute.xlu0 2
        %850 = vperm.xlu0 %849, %v689
        %v851 = vpop.permute.xlu0 %850
        %853 = vset.pattern.permute.xlu0 2
        %854 = vperm.xlu0 %853, %v690
        %v855 = vpop.permute.xlu0 %854
        %857 = vset.pattern.permute.xlu0 2
        %858 = vperm.xlu0 %857, %v691
        %v859 = vpop.permute.xlu0 %858
        %861 = vset.pattern.permute.xlu0 2
        %862 = vperm.xlu0 %861, %v692
        %v863 = vpop.permute.xlu0 %862
        %865 = vset.pattern.permute.xlu0 2
        %866 = vperm.xlu0 %865, %v693
        %v867 = vpop.permute.xlu0 %866
        %869 = vset.pattern.permute.xlu0 2
        %870 = vperm.xlu0 %869, %v694
        %v871 = vpop.permute.xlu0 %870
        %873 = vset.pattern.permute.xlu0 2
        %874 = vperm.xlu0 %873, %v695
        %v875 = vpop.permute.xlu0 %874
        %v877 = vmul.f32 %v837, %v847
        %v878 = vmul.f32 %v838, %v851
        %v879 = vmul.f32 %v839, %v855
        %v880 = vmul.f32 %v840, %v859
        %v881 = vmul.f32 %v841, %v863
        %v882 = vmul.f32 %v842, %v867
        %v883 = vmul.f32 %v843, %v871
        %v884 = vmul.f32 %v844, %v875
        %v885 = vadd.f32 %v877, %v878
        %v886 = vadd.f32 %v885, %v879
        %v887 = vadd.f32 %v886, %v880
        %v888 = vadd.f32 %v887, %v881
        %v889 = vadd.f32 %v888, %v882
        %v890 = vadd.f32 %v889, %v883
        %v891 = vadd.f32 %v890, %v884
        %v892 = vrot.slane %v891, 4
        %v893 = vadd.f32 %v891, %v892
        %v894 = vrot.slane %v893, 2
        %v895 = vadd.f32 %v893, %v894
        %v896 = vrot.slane %v895, 1
        %v897 = vadd.f32 %v895, %v896
        %v898 = vmul.f32 %v897, 2.0
        %v899 = vmax.f32 %v757, %v827
        %v900 = vmax.f32 %v899, %v757
        %v901 = vmax.f32 %v900, %v898
        %v902 = vsub.f32 %v827, %v901
        %v903 = vmul.f32 %v902, 1.442695
        %v904 = vpow.pop %v903
        %v905 = vadd.f32 %v904, 0.0
        %v906 = vsub.f32 %v757, %v901
        %v907 = vmul.f32 %v906, 1.442695
        %v908 = vpow.pop %v907
        %v909 = vadd.f32 %v905, %v908
        %v910 = vsub.f32 %v898, %v901
        %v911 = vmul.f32 %v910, 1.442695
        %v912 = vpow.pop %v911
        %v913 = vadd.f32 %v909, %v912
        %v914 = vrcp.pop %v913
        %v915 = vmul.f32 %v908, %v914
        %v916 = vld [vmem:[%s494] sm:$0x1]
        %v917 = vsub.f32 0.0, %v916
        %v918 = vmul.f32 %v917, 1.442695
        %v919 = vpow.pop %v918
        %v920 = vadd.f32 %v919, 1.0
        %v921 = vrcp.pop %v920
        %v922 = vmul.f32 1.0, %v921
        %v923 = vmul.f32 %v922, %v915
        %v924 = vsub.f32 1.0, %v922
        %v925 = vmul.f32 %v924, %v670
        %v926 = vadd.f32 %v923, %v925
        %927 = vst [vmem:[%s480] sm:$0x1] %v926
        %s928 = sand.u32 %s241, 1
        %s929 = scalar_lea.sflag [#allocation4], %s928
        %s930 = sand.u32 %s241, 1
        %s931 = scalar_lea.vmem [#allocation10], %s930
        // Predicated region
        $region65: #{tpu_custom_call.1} parent=47 // pred_check
          %p932 = pneg %p251
        $region66: #{tpu_custom_call.1} parent=47 // pred_check_branch
          %934 = sbr.rel (%p932) target = $region68
        $region67: #{tpu_custom_call.1} parent=47 // pred_region
          %s936 = ssub.s32 16, 16
          %937 = vsyncadd %s929, %s936
          %s938 = sadd.s32 %s35, %s34
          %s939 = smul.addr %s938, 16
          %s940 = scalar_lea.hbm %s7, %s939
          %s942 = sshll.u32 %s931, 4
          %s943 = int_to_ptr.vmem [resolvable:$true] %s942
          %945 = dma.vmem_to_hbm [thread:$0]  %s943, 16, %s940, %s929
        $region68: #{tpu_custom_call.1} parent=47 // pred_fallthru
          _
      $region48: #{tpu_custom_call.1} parent=5 // pred_fallthru
        _
      %p946 = scmp.le.s32.totalorder 2, %s25
      // Predicated region
      $region69: #{tpu_custom_call.1} parent=5 // pred_check
        %p947 = pneg %p946
      $region70: #{tpu_custom_call.1} parent=5 // pred_check_branch
        %949 = sbr.rel (%p947) target = $region72
      $region71: #{tpu_custom_call.1} parent=5 // pred_region
        %s950 = ssub.s32 %s25, 2
        // Predicated region
        $region73: #{tpu_custom_call.1} parent=71 // pred_check
          %p951 = pneg %p257
        $region74: #{tpu_custom_call.1} parent=71 // pred_check_branch
          %953 = sbr.rel (%p951) target = $region76
        $region75: #{tpu_custom_call.1} parent=71 // pred_region
          %s954 = sand.u32 %s242, 1
          %s955 = scalar_lea.sflag [#allocation4], %s954
          %s956 = sand.u32 %s242, 1
          %s957 = scalar_lea.vmem [#allocation10], %s956
          %958 = dma.done %s955, 16
        $region76: #{tpu_custom_call.1} parent=71 // pred_fallthru
          _
      $region72: #{tpu_custom_call.1} parent=5 // pred_fallthru
        _
    $region6: #{tpu_custom_call.1} parent=1 // loop_footer
      %s29 = sadd.s32 1, %s25
    $region7: #{tpu_custom_call.1} parent=1 // loop_footer_branch
      %24 = sbr.rel target = $region3
    $region8: #{tpu_custom_call.1} parent=1 // loop_exit
      _
    %959 = vsyncpa [#allocation3], 1
    %s960 = scalar_lea.sflag [#allocation3], 1
    %961 = vsyncpa %s960, 1
    %962 = vsyncpa [#allocation6], 1
    %s963 = scalar_lea.sflag [#allocation6], 1
    %964 = vsyncpa %s963, 1
    %965 = vsyncpa [#allocation9], 1
    %s966 = scalar_lea.sflag [#allocation9], 1
    %967 = vsyncpa %s966, 1
    %968 = vsyncpa [#allocation4], 1
    %s969 = scalar_lea.sflag [#allocation4], 1
    %970 = vsyncpa %s969, 1

</llo_original>
